<compile_context>
chip_gen: v7x
topology: tpu7x:2x2x1
jax: 0.10.0
libtpu: 0.0.40
codegen_flags: <defaults>
</compile_context>

<pallas_src>
import functools

import jax
import jax.numpy as jnp
from jax.experimental import pallas as pl
from jax.experimental.pallas import tpu as pltpu


def attention_kernel(h_ref, w1_ref, b1_ref, w2r_ref, ctx_ref, attn_ref,
                     m_sc, l_sc, acc_sc, scores_sc, *, seq_total):
    bblk, sblk, hdim = h_ref.shape
    hh = w1_ref.shape[1]
    num_seq_blocks = scores_sc.shape[0]            # static
    s_idx = pl.program_id(1)

    @pl.when(s_idx == 0)
    def _():
        m_sc[...] = jnp.full_like(m_sc, -jnp.inf)
        l_sc[...] = jnp.zeros_like(l_sc)
        acc_sc[...] = jnp.zeros_like(acc_sc)

    h = h_ref[...]                                  # (Bblk, Sblk, H), input dtype

    need_mask = (seq_total % sblk) != 0             # static
    if need_mask:
        # Ragged last seq block: zero padded rows (keeps garbage inf/nan out of
        # the weighted sum) and force their scores to -inf below.
        col = jax.lax.broadcasted_iota(jnp.int32, (bblk, sblk), 1)
        valid = (s_idx * sblk + col) < seq_total    # (Bblk, Sblk)
        h = jnp.where(valid[:, :, None], h, jnp.zeros_like(h))

    # First Linear on the MXU (f32 accumulate); tanh on the EUP.
    # Reshape is a free relayout because Sblk % 8 == 0 (or Sblk == S, tiny).
    h2d = h.reshape(bblk * sblk, hdim)
    pre = jnp.dot(h2d, w1_ref[...], preferred_element_type=jnp.float32)
    a1 = jnp.tanh(pre + b1_ref[...])                # (Bblk*Sblk, Hh) f32

    # Second Linear (output width 1): keep off the MXU -> VPU multiply + lane
    # reduce over Hh. Result is lane-major (Bblk, Sblk) with seq on lanes.
    scores = jnp.sum(a1.reshape(bblk, sblk, hh) * w2r_ref[...], axis=-1)
    # b2 bias intentionally omitted: softmax over seq is shift-invariant.

    if need_mask:
        scores = jnp.where(valid, scores, -jnp.inf)

    # Stash raw scores (resident f32 scratch, indexed on the leading axis) so
    # the exact attention weights can be emitted once the global max /
    # denominator are known.
    scores_sc[s_idx] = scores

    # Online softmax update.
    m_old = m_sc[...]
    m_new = jnp.maximum(m_old, jnp.max(scores, axis=-1, keepdims=True))
    corr = jnp.exp(m_old - m_new)                   # (Bblk, 1)
    p = jnp.exp(scores - m_new)                     # (Bblk, Sblk) f32
    l_sc[...] = corr * l_sc[...] + jnp.sum(p, axis=-1, keepdims=True)
    # Weighted sum on the VPU (multiply + sublane reduce over Sblk), f32 acc.
    acc_sc[...] = corr * acc_sc[...] + jnp.sum(
        h.astype(jnp.float32) * p[:, :, None], axis=1)
    m_sc[...] = m_new

    @pl.when(s_idx == num_seq_blocks - 1)
    def _():
        inv = pl.reciprocal(l_sc[...], approx=False)     # exact; kernel is HBM-bound
        ctx_ref[...] = (acc_sc[...] * inv).astype(ctx_ref.dtype)
        # Emit the exact softmax weights as a lane-dense (Bblk, S) slab.
        for j in range(num_seq_blocks):                  # static unroll
            w_j = jnp.exp(scores_sc[j] - m_sc[...]) * inv
            lo = j * sblk
            width = min(sblk, seq_total - lo)
            attn_ref[:, lo:lo + width] = w_j[:, :width].astype(attn_ref.dtype)


def _round_up(x, m):
    return ((x + m - 1) // m) * m


def _vmem_plan():
    """(live-set budget, vmem_limit_bytes); conservative v7x fallback."""
    phys = 64 << 20                                 # assume v7x (smallest VMEM)
    try:
        info = pltpu.get_tpu_info()
        phys = int(getattr(info, "vmem_capacity_bytes", phys))
    except Exception:
        pass
    if phys >= (96 << 20):                          # v5e / v6e: 128 MiB physical
        return 72 << 20, 96 << 20
    return 36 << 20, 48 << 20                       # v7x: 64 MiB physical


def _plan_tiles(B, S, H, Hh, in_isz, out_isz, budget_bytes):
    """Pick (Bblk, Sblk): largest tiles whose full live set fits the budget."""
    def sg_of(sblk):
        return ((S + sblk - 1) // sblk) * sblk

    def footprint(bblk, sblk):
        # per-step: double-buffered input tile + f32 tile copy/product + pre/a1
        tile = bblk * sblk * (2 * H * in_isz + 4 * H + 8 * Hh + 16)
        # per-batch-block residents: double-buffered outputs, acc, scores scratch
        res = bblk * (2 * (H + S) * out_isz + 8 * H + 4 * sg_of(sblk) + 32)
        wts = 2 * 4 * (H * Hh + 2 * Hh)
        return tile + res + wts

    def bblk_opts():
        opts = {B}
        opts.update(range(8, B, 8))
        return sorted(opts, reverse=True)

    def sblk_opts():
        opts = {S} if (S <= 8 or S % 8 == 0) else set()   # keep Sblk % 8 == 0
        opts.update(range(8, S, 8))
        return sorted(opts, reverse=True)

    for sblk in sblk_opts():                         # prefer whole-seq residency
        for bblk in bblk_opts():                     # prefer fattest batch block
            if footprint(bblk, sblk) <= budget_bytes:
                return bblk, sblk
    return (B if B < 8 else 8), (S if S < 8 else 8)  # smallest legal tile


def attention_layer(hidden_states, w1, b1, w2, b2, *, block_batch=None,
                    block_seq=None, vmem_limit_bytes=None):
    """hidden_states: (B, S, H). Returns (context (B, H), attn_weights (B, S, 1))."""
    B, S, H = hidden_states.shape
    Hh = w1.shape[1]
    out_dtype = hidden_states.dtype
    del b2   # softmax over seq is shift-invariant -> scalar bias cancels exactly

    budget, auto_limit = _vmem_plan()
    if vmem_limit_bytes is None:
        vmem_limit_bytes = auto_limit
    else:
        budget = min(budget, int(vmem_limit_bytes) * 3 // 4)

    bblk, sblk = _plan_tiles(B, S, H, Hh, hidden_states.dtype.itemsize,
                             jnp.dtype(out_dtype).itemsize, budget)
    if block_batch is not None:
        bblk = int(block_batch)
    elif B >= 16:
        # v7x has 2 TensorCores: keep >= 2 steps on the "parallel" batch axis.
        bblk = min(bblk, _round_up(-(-B // 2), 8))
    if block_seq is not None:
        sblk = int(block_seq)

    assert bblk == B or bblk % 8 == 0, "block_batch must be a multiple of 8 or == B"
    assert sblk == S or sblk % 8 == 0, "block_seq must be a multiple of 8 or == S"

    nb = pl.cdiv(B, bblk)
    nsb = pl.cdiv(S, sblk)

    b1_2d = b1.reshape(1, Hh)
    w2_row = w2.reshape(1, Hh)                       # (Hh, 1) -> lane row

    kernel = functools.partial(attention_kernel, seq_total=S)

    # Optionally deepen input buffering when per-step tiles are tiny.
    h_index = lambda b, s: (b, s, 0)
    h_spec = pl.BlockSpec((bblk, sblk, H), h_index)
    tile_bytes = bblk * sblk * H * hidden_states.dtype.itemsize
    if tile_bytes < (1 << 20) and nb * nsb >= 4:
        try:
            h_spec = pl.BlockSpec((bblk, sblk, H), h_index,
                                  pipeline_mode=pl.Buffered(3))
        except Exception:
            pass   # older Pallas without pipeline_mode: keep default 2 buffers

    ctx, attn2d = pl.pallas_call(
        kernel,
        out_shape=(
            jax.ShapeDtypeStruct((B, H), out_dtype),
            jax.ShapeDtypeStruct((B, S), out_dtype),     # lane-dense attn slab
        ),
        grid_spec=pltpu.PrefetchScalarGridSpec(
            num_scalar_prefetch=0,
            grid=(nb, nsb),                              # seq (reduction) axis last
            in_specs=[
                h_spec,                                              # hidden_states
                pl.BlockSpec((H, Hh), lambda b, s: (0, 0)),          # W1
                pl.BlockSpec((1, Hh), lambda b, s: (0, 0)),          # b1 (row)
                pl.BlockSpec((1, Hh), lambda b, s: (0, 0)),          # W2 as a row
            ],
            out_specs=(
                pl.BlockSpec((bblk, H), lambda b, s: (b, 0)),        # context
                pl.BlockSpec((bblk, S), lambda b, s: (b, 0)),        # attn weights
            ),
            scratch_shapes=[
                pltpu.VMEM((bblk, 1), jnp.float32),              # running max
                pltpu.VMEM((bblk, 1), jnp.float32),              # running denom
                pltpu.VMEM((bblk, H), jnp.float32),              # unnormalized ctx
                pltpu.VMEM((nsb, bblk, sblk), jnp.float32),      # raw scores
            ],
        ),
        compiler_params=pltpu.CompilerParams(
            dimension_semantics=("parallel", "arbitrary"),
            vmem_limit_bytes=int(vmem_limit_bytes),
        ),
    )(hidden_states, w1, b1_2d, w2_row)

    # Padded rows of a ragged last batch block may hold NaN/Inf transients in
    # VMEM, but they are row-isolated and never written back.
    return ctx, attn2d[..., None]


def attention_layer_ref(hidden_states, w1, b1, w2, b2):
    """Plain-JAX reference reproducing the PyTorch forward exactly."""
    scores = jnp.tanh(hidden_states @ w1 + b1) @ w2 + b2        # (B, S, 1)
    attn = jax.nn.softmax(scores, axis=1)                       # softmax over seq
    ctx = jnp.sum(attn * hidden_states, axis=1)                 # (B, H)
    return ctx, attn


if __name__ == "__main__":
    H = 32
    Hh = H // 2

    key = jax.random.PRNGKey(0)
    k_w1, k_b1, k_w2, k_b2, k_x = jax.random.split(key, 5)

    # Deterministic parameter init (shapes from nn.Linear(H, H//2), nn.Linear(H//2, 1)).
    bound1 = 1.0 / (H ** 0.5)
    bound2 = 1.0 / (Hh ** 0.5)
    w1 = jax.random.uniform(k_w1, (H, Hh), minval=-bound1, maxval=bound1, dtype=jnp.float32)
    b1 = jax.random.uniform(k_b1, (Hh,), minval=-bound1, maxval=bound1, dtype=jnp.float32)
    w2 = jax.random.uniform(k_w2, (Hh, 1), minval=-bound2, maxval=bound2, dtype=jnp.float32)
    b2 = jax.random.uniform(k_b2, (1,), minval=-bound2, maxval=bound2, dtype=jnp.float32)

    cases = [
        dict(B=4, S=8, kw={}, desc="single block"),
        dict(B=24, S=8, kw={}, desc="multiple batch blocks (ragged last block)"),
        dict(B=8, S=16, kw=dict(block_seq=8), desc="seq-tiled online softmax"),
    ]
    for case in cases:
        B, S = case["B"], case["S"]
        kx = jax.random.fold_in(k_x, B * 1000 + S)
        hidden_states = jax.random.normal(kx, (B, S, H), dtype=jnp.float32)

        ctx, attn = attention_layer(hidden_states, w1, b1, w2, b2, **case["kw"])
        jax.block_until_ready((ctx, attn))

        ctx_ref, attn_ref = attention_layer_ref(hidden_states, w1, b1, w2, b2)
        assert ctx.shape == (B, H) and attn.shape == (B, S, 1), case["desc"]
        assert jnp.allclose(ctx, ctx_ref, atol=1e-4, rtol=1e-4), case["desc"]
        assert jnp.allclose(attn, attn_ref, atol=1e-4, rtol=1e-4), case["desc"]

    print("KERNEL_OK")
</pallas_src>

<mosaic_0001>
module attributes {stable_mosaic.version = 11 : i64} {
  func.func @attention_kernel(%arg0: i32, %arg1: i32, %arg2: memref<4x8x32xf32, #tpu.memory_space<vmem>>, %arg3: memref<32x16xf32, #tpu.memory_space<vmem>>, %arg4: memref<1x16xf32, #tpu.memory_space<vmem>>, %arg5: memref<1x16xf32, #tpu.memory_space<vmem>>, %arg6: memref<4x32xf32, #tpu.memory_space<vmem>>, %arg7: memref<4x8xf32, #tpu.memory_space<vmem>>, %arg8: memref<4x1xf32, #tpu.memory_space<vmem>>, %arg9: memref<4x1xf32, #tpu.memory_space<vmem>>, %arg10: memref<4x32xf32, #tpu.memory_space<vmem>>, %arg11: memref<1x4x8xf32, #tpu.memory_space<vmem>>) attributes {dimension_semantics = [#tpu.dimension_semantics<parallel>, #tpu.dimension_semantics<arbitrary>], iteration_bounds = array<i64: 1, 1>, scalar_prefetch = 0 : i64, scratch_operands = 4 : i64, tpu.core_type = #tpu.core_type<tc>, window_params = [{transform_indices = @transform_0, window_bounds = array<i64: 4, 8, 32>}, {pipeline_mode = #tpu.pipeline_mode<synchronous>, transform_indices = @transform_1, window_bounds = array<i64: 32, 16>}, {pipeline_mode = #tpu.pipeline_mode<synchronous>, transform_indices = @transform_2, window_bounds = array<i64: 1, 16>}, {pipeline_mode = #tpu.pipeline_mode<synchronous>, transform_indices = @transform_3, window_bounds = array<i64: 1, 16>}, {transform_indices = @transform_4, window_bounds = array<i64: 4, 32>}, {transform_indices = @transform_5, window_bounds = array<i64: 4, 8>}]} {
    %c0_i32 = arith.constant 0 : i32
    %0 = arith.cmpi eq, %arg1, %c0_i32 : i32
    %1 = arith.extui %0 : i1 to i32
    %c0_i32_0 = arith.constant 0 : i32
    %2 = arith.cmpi ne, %1, %c0_i32_0 : i32
    scf.if %2 {
      %cst_29 = arith.constant 0xFF800000 : f32
      %49 = vector.broadcast %cst_29 : f32 to vector<4x1xf32>
      %c0_30 = arith.constant 0 : index
      %c0_31 = arith.constant 0 : index
      %50 = vector.load %arg8[%c0_30, %c0_31] : memref<4x1xf32, #tpu.memory_space<vmem>>, vector<4x1xf32>
      tpu.vector_store %arg8[%c0_30, %c0_31], %49 {strides = array<i32>} : memref<4x1xf32, #tpu.memory_space<vmem>>, vector<4x1xf32>,
      %cst_32 = arith.constant 0.000000e+00 : f32
      %51 = vector.broadcast %cst_32 : f32 to vector<4x1xf32>
      %c0_33 = arith.constant 0 : index
      %c0_34 = arith.constant 0 : index
      %52 = vector.load %arg9[%c0_33, %c0_34] : memref<4x1xf32, #tpu.memory_space<vmem>>, vector<4x1xf32>
      tpu.vector_store %arg9[%c0_33, %c0_34], %51 {strides = array<i32>} : memref<4x1xf32, #tpu.memory_space<vmem>>, vector<4x1xf32>,
      %cst_35 = arith.constant 0.000000e+00 : f32
      %53 = vector.broadcast %cst_35 : f32 to vector<4x32xf32>
      %c0_36 = arith.constant 0 : index
      %c0_37 = arith.constant 0 : index
      %54 = vector.load %arg10[%c0_36, %c0_37] : memref<4x32xf32, #tpu.memory_space<vmem>>, vector<4x32xf32>
      tpu.vector_store %arg10[%c0_36, %c0_37], %53 {strides = array<i32>} : memref<4x32xf32, #tpu.memory_space<vmem>>, vector<4x32xf32>,
    } else {
    }
    %c0 = arith.constant 0 : index
    %c0_1 = arith.constant 0 : index
    %c0_2 = arith.constant 0 : index
    %3 = vector.load %arg2[%c0, %c0_1, %c0_2] : memref<4x8x32xf32, #tpu.memory_space<vmem>>, vector<4x8x32xf32>
    %4 = vector.shape_cast %3 : vector<4x8x32xf32> to vector<32x32xf32>
    %c0_3 = arith.constant 0 : index
    %c0_4 = arith.constant 0 : index
    %5 = vector.load %arg3[%c0_3, %c0_4] : memref<32x16xf32, #tpu.memory_space<vmem>>, vector<32x16xf32>
    %cst = arith.constant dense<0.000000e+00> : vector<32x16xf32>
    %6 = tpu.matmul %4, %5, %cst {dimension_numbers = #tpu.dot_dimension_numbers<[1], [0], [0], [1], [0, 0, 1, 1], [], []>} : vector<32x32xf32>, vector<32x16xf32>, vector<32x16xf32> -> vector<32x16xf32>
    %c0_5 = arith.constant 0 : index
    %c0_6 = arith.constant 0 : index
    %7 = vector.load %arg4[%c0_5, %c0_6] : memref<1x16xf32, #tpu.memory_space<vmem>>, vector<1x16xf32>
    %8 = vector.broadcast %7 : vector<1x16xf32> to vector<32x16xf32>
    %9 = arith.addf %6, %8 : vector<32x16xf32>
    %10 = math.tanh %9 : vector<32x16xf32>
    %11 = vector.shape_cast %10 : vector<32x16xf32> to vector<4x8x16xf32>
    %c0_7 = arith.constant 0 : index
    %c0_8 = arith.constant 0 : index
    %12 = vector.load %arg5[%c0_7, %c0_8] : memref<1x16xf32, #tpu.memory_space<vmem>>, vector<1x16xf32>
    %13 = vector.shape_cast %12 : vector<1x16xf32> to vector<1x1x16xf32>
    %14 = vector.broadcast %13 : vector<1x1x16xf32> to vector<4x8x16xf32>
    %15 = arith.mulf %11, %14 : vector<4x8x16xf32>
    %cst_9 = arith.constant dense<0.000000e+00> : vector<4x8xf32>
    %16 = vector.multi_reduction <add>, %15, %cst_9 [2] : vector<4x8x16xf32> to vector<4x8xf32>
    %17 = arith.index_cast %arg1 : i32 to index
    %c0_10 = arith.constant 0 : index
    %c0_11 = arith.constant 0 : index
    %18 = vector.load %arg11[%17, %c0_10, %c0_11] : memref<1x4x8xf32, #tpu.memory_space<vmem>>, vector<1x4x8xf32>
    %19 = vector.shape_cast %18 : vector<1x4x8xf32> to vector<4x8xf32>
    %20 = vector.shape_cast %16 : vector<4x8xf32> to vector<1x4x8xf32>
    tpu.vector_store %arg11[%17, %c0_10, %c0_11], %20 {strides = array<i32>} : memref<1x4x8xf32, #tpu.memory_space<vmem>>, vector<1x4x8xf32>,
    %c0_12 = arith.constant 0 : index
    %c0_13 = arith.constant 0 : index
    %21 = vector.load %arg8[%c0_12, %c0_13] : memref<4x1xf32, #tpu.memory_space<vmem>>, vector<4x1xf32>
    %cst_14 = arith.constant dense<0xFF800000> : vector<4xf32>
    %22 = vector.multi_reduction <maximumf>, %16, %cst_14 [1] : vector<4x8xf32> to vector<4xf32>
    %23 = vector.shape_cast %22 : vector<4xf32> to vector<4x1xf32>
    %24 = arith.maximumf %21, %23 : vector<4x1xf32>
    %25 = arith.subf %21, %24 : vector<4x1xf32>
    %26 = math.exp %25 : vector<4x1xf32>
    %27 = vector.broadcast %24 : vector<4x1xf32> to vector<4x8xf32>
    %28 = arith.subf %16, %27 : vector<4x8xf32>
    %29 = math.exp %28 : vector<4x8xf32>
    %c0_15 = arith.constant 0 : index
    %c0_16 = arith.constant 0 : index
    %30 = vector.load %arg9[%c0_15, %c0_16] : memref<4x1xf32, #tpu.memory_space<vmem>>, vector<4x1xf32>
    %31 = arith.mulf %26, %30 : vector<4x1xf32>
    %cst_17 = arith.constant dense<0.000000e+00> : vector<4xf32>
    %32 = vector.multi_reduction <add>, %29, %cst_17 [1] : vector<4x8xf32> to vector<4xf32>
    %33 = vector.shape_cast %32 : vector<4xf32> to vector<4x1xf32>
    %34 = arith.addf %31, %33 : vector<4x1xf32>
    %c0_18 = arith.constant 0 : index
    %c0_19 = arith.constant 0 : index
    %35 = vector.load %arg9[%c0_18, %c0_19] : memref<4x1xf32, #tpu.memory_space<vmem>>, vector<4x1xf32>
    tpu.vector_store %arg9[%c0_18, %c0_19], %34 {strides = array<i32>} : memref<4x1xf32, #tpu.memory_space<vmem>>, vector<4x1xf32>,
    %c0_20 = arith.constant 0 : index
    %c0_21 = arith.constant 0 : index
    %36 = vector.load %arg10[%c0_20, %c0_21] : memref<4x32xf32, #tpu.memory_space<vmem>>, vector<4x32xf32>
    %37 = vector.broadcast %26 : vector<4x1xf32> to vector<4x32xf32>
    %38 = arith.mulf %37, %36 : vector<4x32xf32>
    %39 = vector.shape_cast %29 : vector<4x8xf32> to vector<4x8x1xf32>
    %40 = vector.broadcast %39 : vector<4x8x1xf32> to vector<4x8x32xf32>
    %41 = arith.mulf %3, %40 : vector<4x8x32xf32>
    %cst_22 = arith.constant dense<0.000000e+00> : vector<4x32xf32>
    %42 = vector.multi_reduction <add>, %41, %cst_22 [1] : vector<4x8x32xf32> to vector<4x32xf32>
    %43 = arith.addf %38, %42 : vector<4x32xf32>
    %c0_23 = arith.constant 0 : index
    %c0_24 = arith.constant 0 : index
    %44 = vector.load %arg10[%c0_23, %c0_24] : memref<4x32xf32, #tpu.memory_space<vmem>>, vector<4x32xf32>
    tpu.vector_store %arg10[%c0_23, %c0_24], %43 {strides = array<i32>} : memref<4x32xf32, #tpu.memory_space<vmem>>, vector<4x32xf32>,
    %c0_25 = arith.constant 0 : index
    %c0_26 = arith.constant 0 : index
    %45 = vector.load %arg8[%c0_25, %c0_26] : memref<4x1xf32, #tpu.memory_space<vmem>>, vector<4x1xf32>
    tpu.vector_store %arg8[%c0_25, %c0_26], %24 {strides = array<i32>} : memref<4x1xf32, #tpu.memory_space<vmem>>, vector<4x1xf32>,
    %c0_i32_27 = arith.constant 0 : i32
    %46 = arith.cmpi eq, %arg1, %c0_i32_27 : i32
    %47 = arith.extui %46 : i1 to i32
    %c0_i32_28 = arith.constant 0 : i32
    %48 = arith.cmpi ne, %47, %c0_i32_28 : i32
    scf.if %48 {
      %c0_29 = arith.constant 0 : index
      %c0_30 = arith.constant 0 : index
      %49 = vector.load %arg9[%c0_29, %c0_30] : memref<4x1xf32, #tpu.memory_space<vmem>>, vector<4x1xf32>
      %50 = tpu.reciprocal %49 : vector<4x1xf32> -> vector<4x1xf32>
      %c0_31 = arith.constant 0 : index
      %c0_32 = arith.constant 0 : index
      %51 = vector.load %arg10[%c0_31, %c0_32] : memref<4x32xf32, #tpu.memory_space<vmem>>, vector<4x32xf32>
      %52 = vector.broadcast %50 : vector<4x1xf32> to vector<4x32xf32>
      %53 = arith.mulf %51, %52 : vector<4x32xf32>
      %c0_33 = arith.constant 0 : index
      %c0_34 = arith.constant 0 : index
      %54 = vector.load %arg6[%c0_33, %c0_34] : memref<4x32xf32, #tpu.memory_space<vmem>>, vector<4x32xf32>
      tpu.vector_store %arg6[%c0_33, %c0_34], %53 {strides = array<i32>} : memref<4x32xf32, #tpu.memory_space<vmem>>, vector<4x32xf32>,
      %c0_35 = arith.constant 0 : index
      %c0_36 = arith.constant 0 : index
      %c0_37 = arith.constant 0 : index
      %55 = vector.load %arg11[%c0_35, %c0_36, %c0_37] : memref<1x4x8xf32, #tpu.memory_space<vmem>>, vector<1x4x8xf32>
      %56 = vector.shape_cast %55 : vector<1x4x8xf32> to vector<4x8xf32>
      %c0_38 = arith.constant 0 : index
      %c0_39 = arith.constant 0 : index
      %57 = vector.load %arg8[%c0_38, %c0_39] : memref<4x1xf32, #tpu.memory_space<vmem>>, vector<4x1xf32>
      %58 = vector.broadcast %57 : vector<4x1xf32> to vector<4x8xf32>
      %59 = arith.subf %56, %58 : vector<4x8xf32>
      %60 = math.exp %59 : vector<4x8xf32>
      %61 = vector.broadcast %50 : vector<4x1xf32> to vector<4x8xf32>
      %62 = arith.mulf %60, %61 : vector<4x8xf32>
      %c0_40 = arith.constant 0 : index
      %c0_41 = arith.constant 0 : index
      %63 = vector.load %arg7[%c0_40, %c0_41] : memref<4x8xf32, #tpu.memory_space<vmem>>, vector<4x8xf32>
      tpu.vector_store %arg7[%c0_40, %c0_41], %62 {strides = array<i32>} : memref<4x8xf32, #tpu.memory_space<vmem>>, vector<4x8xf32>,
    } else {
    }
    return
  }
  func.func @transform_0(%arg0: i32, %arg1: i32) -> (i32, i32, i32) {
    %c0_i32 = arith.constant 0 : i32
    %c0_i32_0 = arith.constant 0 : i32
    return %arg0, %arg1, %c0_i32 : i32, i32, i32
  }
  func.func @transform_1(%arg0: i32, %arg1: i32) -> (i32, i32) {
    %c0_i32 = arith.constant 0 : i32
    %c0_i32_0 = arith.constant 0 : i32
    %c0_i32_1 = arith.constant 0 : i32
    return %c0_i32, %c0_i32_0 : i32, i32
  }
  func.func @transform_2(%arg0: i32, %arg1: i32) -> (i32, i32) {
    %c0_i32 = arith.constant 0 : i32
    %c0_i32_0 = arith.constant 0 : i32
    %c0_i32_1 = arith.constant 0 : i32
    return %c0_i32, %c0_i32_0 : i32, i32
  }
  func.func @transform_3(%arg0: i32, %arg1: i32) -> (i32, i32) {
    %c0_i32 = arith.constant 0 : i32
    %c0_i32_0 = arith.constant 0 : i32
    %c0_i32_1 = arith.constant 0 : i32
    return %c0_i32, %c0_i32_0 : i32, i32
  }
  func.func @transform_4(%arg0: i32, %arg1: i32) -> (i32, i32) {
    %c0_i32 = arith.constant 0 : i32
    %c0_i32_0 = arith.constant 0 : i32
    return %arg0, %c0_i32 : i32, i32
  }
  func.func @transform_5(%arg0: i32, %arg1: i32) -> (i32, i32) {
    %c0_i32 = arith.constant 0 : i32
    %c0_i32_0 = arith.constant 0 : i32
    return %arg0, %c0_i32 : i32, i32
  }
}

</mosaic_0001>

<llo_original>
// kernel: tpu_custom_call.1
$region0: #{tpu_custom_call.1}
  #allocation0 [shape = 'u32[]', space=smem, size = 0x4, offset = 0x4, fixed_abs, tag = 'smem constant byte address 0x4 - core index']
  #allocation1 [shape = 'u32[144,128]{1,0:T(1,128)}', space=vmem, size = 0x12000, scoped, tag = 'internal scratch']
  #allocation2 [shape = 'f32[4,1]{1,0:T(4,128)}', space=vmem, size = 0x800, scoped, tag = 'scratch operand']
  #allocation3 [shape = 'f32[4,1]{1,0:T(4,128)}', space=vmem, size = 0x800, scoped, tag = 'scratch operand']
  #allocation4 [shape = 'f32[4,32]{1,0:T(4,128)}', space=vmem, size = 0x800, scoped, tag = 'scratch operand']
  #allocation5 [shape = 'f32[1,4,8]{2,1,0:T(4,128)}', space=vmem, size = 0x800, scoped, tag = 'scratch operand']
  %s0 = inlined_call_operand.vmem [shape: f32[4,8,32], index: 0, kind: input, shape index: {}]
  %s1 = inlined_call_operand.vmem [shape: f32[32,16], index: 1, kind: input, shape index: {}]
  %s2 = inlined_call_operand.vmem [shape: f32[1,16], index: 2, kind: input, shape index: {}]
  %s3 = inlined_call_operand.vmem [shape: f32[1,16], index: 3, kind: input, shape index: {}]
  %s4 = inlined_call_operand.hbm [shape: f32[4,32], index: 4, kind: output, shape index: {0}]
  %s5 = inlined_call_operand.hbm [shape: f32[4,8], index: 5, kind: output, shape index: {1}]
  %6 = xla_tuple %s4, %s5
  %s7 = sld [smem:[#allocation0]]
  $region42: #{tpu_custom_call.1} parent=0
    _
  %s9 = ssub.s32 1, %s7
  %s10 = scalar_select 0, %s9, %s7
  $region1: #{tpu_custom_call.1} parent=0
    #allocation6 [shape = 'u8[2048]{0}', space=vmem, size = 0x800, scoped, tag = 'output window, operand 0, single buffered']
    #allocation7 [shape = 's32[1]{0}', space=sflag, size = 0x4, scoped, tag = 'scoped memory for tpu_custom_call.1']
    #allocation8 [shape = 'u8[2048]{0}', space=vmem, size = 0x800, scoped, tag = 'output window, operand 1, single buffered']
    #allocation9 [shape = 's32[1]{0}', space=sflag, size = 0x4, scoped, tag = 'scoped memory for tpu_custom_call.1']
    %11 = vsyncpa [#allocation7], 0
    %12 = vsyncpa [#allocation9], 0
    // Predicated region
    $region2: #{tpu_custom_call.1} parent=1 // pred_check
      _
    $region3: #{tpu_custom_call.1} parent=1 // pred_check_branch
      %14 = sbr.rel (0) target = $region5
    $region4: #{tpu_custom_call.1} parent=1 // pred_region
      _
    $region5: #{tpu_custom_call.1} parent=1 // pred_fallthru
      _
    // Predicated region
    $region6: #{tpu_custom_call.1} parent=1 // pred_check
      _
    $region7: #{tpu_custom_call.1} parent=1 // pred_check_branch
      %16 = sbr.rel (0) target = $region9
    $region8: #{tpu_custom_call.1} parent=1 // pred_region
      _
    $region9: #{tpu_custom_call.1} parent=1 // pred_fallthru
      _
    // Predicated region
    $region10: #{tpu_custom_call.1} parent=1 // pred_check
      _
    $region11: #{tpu_custom_call.1} parent=1 // pred_check_branch
      %18 = sbr.rel (0) target = $region13
    $region12: #{tpu_custom_call.1} parent=1 // pred_region
      _
    $region13: #{tpu_custom_call.1} parent=1 // pred_fallthru
      _
    // Predicated region
    $region14: #{tpu_custom_call.1} parent=1 // pred_check
      _
    $region15: #{tpu_custom_call.1} parent=1 // pred_check_branch
      %20 = sbr.rel (0) target = $region17
    $region16: #{tpu_custom_call.1} parent=1 // pred_region
      _
    $region17: #{tpu_custom_call.1} parent=1 // pred_fallthru
      _
    %p21 = scmp.eq.s32.totalorder 0, 0
    // Predicated region
    $region18: #{tpu_custom_call.1} parent=1 // pred_check
      %p22 = pneg %p21
    $region19: #{tpu_custom_call.1} parent=1 // pred_check_branch
      %24 = sbr.rel (%p22) target = $region21
    $region20: #{tpu_custom_call.1} parent=1 // pred_region
      %vm25 = vcmask 3072
      %26 = vst.msk [vmem:[#allocation2] sm:$0xf] %vm25, -inf
      %27 = vst.msk [vmem:[#allocation3] sm:$0xf] %vm25, 0.0
      %vm28 = vcmask 257024
      %29 = vst.msk [vmem:[#allocation4] sm:$0xf] %vm28, 0.0
    $region21: #{tpu_custom_call.1} parent=1 // pred_fallthru
      _
    %v30 = vld [vmem:[%s0] sm:$0xff]
    %v31 = vld [vmem:[%s0 + $0x8] sm:$0xff]
    %v32 = vld [vmem:[%s0 + $0x10] sm:$0xff]
    %v33 = vld [vmem:[%s0 + $0x18] sm:$0xff]
    %v34 = vld [vmem:[%s1] sm:$0xff]
    %v35 = vld [vmem:[%s1 + $0x8] sm:$0xff]
    %v36 = vld [vmem:[%s1 + $0x10] sm:$0xff]
    %v37 = vld [vmem:[%s1 + $0x18] sm:$0xff]
    %v38 = vld [vmem:[%s2] sm:$0x1]
    %v40 = vlaneseq
    %v41 = vshrl.u32 %v40, 7
    %v42 = vsub.s32 0, %v41
    %v43 = vrot.slane %v38, %v42
    %vm45 = vcmask 261120
    %v47 = vsel %vm45, %v30, 0
    %v50 = vsel %vm45, %v31, 0
    %v53 = vsel %vm45, %v32, 0
    %v56 = vsel %vm45, %v33, 0
    %58 = vmatprep.subr.mxu0 0.0
    %59 = vmatpush1.msra.mxu0 %v34
    %60 = vmatprep.subr.mxu0 0.0
    %61 = vmatpush1.msra.mxu0 %v35
    %62 = vmatprep.subr.mxu0 0.0
    %63 = vmatpush1.msra.mxu0 %v36
    %64 = vmatprep.subr.mxu0 0.0
    %65 = vmatpush1.msra.mxu0 %v37
    %66 = vmatprep.subr.mxu0 0.0
    %67 = vmatpush1.msra.mxu0 0.0
    %68 = vmatprep.subr.mxu0 0.0
    %69 = vmatpush1.msra.mxu0 0.0
    %70 = vmatprep.subr.mxu0 0.0
    %71 = vmatpush1.msra.mxu0 0.0
    %72 = vmatprep.subr.mxu0 0.0
    %73 = vmatpush1.msra.mxu0 0.0
    %74 = vmatprep.subr.mxu0 0.0
    %75 = vmatpush1.msra.mxu0 0.0
    %76 = vmatprep.subr.mxu0 0.0
    %77 = vmatpush1.msra.mxu0 0.0
    %78 = vmatprep.subr.mxu0 0.0
    %79 = vmatpush1.msra.mxu0 0.0
    %80 = vmatprep.subr.mxu0 0.0
    %81 = vmatpush1.msra.mxu0 0.0
    %82 = vmatprep.subr.mxu0 0.0
    %83 = vmatpush1.msra.mxu0 0.0
    %84 = vmatprep.subr.mxu0 0.0
    %85 = vmatpush1.msra.mxu0 0.0
    %86 = vmatprep.subr.mxu0 0.0
    %87 = vmatpush1.msra.mxu0 0.0
    %88 = vmatprep.subr.mxu0 0.0
    %89 = vmatpush1.msra.mxu0 0.0
    %90 = vmatprep.subr.mxu0 0.0
    %91 = vmatpush1.msra.mxu0 0.0
    %92 = vmatprep.subr.mxu0 0.0
    %93 = vmatpush1.msra.mxu0 0.0
    %94 = vmatprep.subr.mxu0 0.0
    %95 = vmatpush1.msra.mxu0 0.0
    %96 = vmatprep.subr.mxu0 0.0
    %97 = vmatpush1.msra.mxu0 0.0
    %98 = vmatprep.subr.mxu0 0.0
    %99 = vmatpush1.msra.mxu0 0.0
    %100 = vmatprep.subr.mxu0 0.0
    %101 = vmatpush1.msra.mxu0 0.0
    %102 = vmatprep.subr.mxu0 0.0
    %103 = vmatpush1.msra.mxu0 0.0
    %104 = vmatprep.subr.mxu0 0.0
    %105 = vmatpush1.msra.mxu0 0.0
    %106 = vmatprep.subr.mxu0 0.0
    %107 = vmatpush1.msra.mxu0 0.0
    %108 = vmatprep.subr.mxu0 0.0
    %109 = vmatpush1.msra.mxu0 0.0
    %110 = vmatprep.subr.mxu0 0.0
    %111 = vmatpush1.msra.mxu0 0.0
    %112 = vmatprep.subr.mxu0 0.0
    %113 = vmatpush1.msra.mxu0 0.0
    %114 = vmatprep.subr.mxu0 0.0
    %115 = vmatpush1.msra.mxu0 0.0
    %116 = vmatprep.subr.mxu0 0.0
    %117 = vmatpush1.msra.mxu0 0.0
    %118 = vmatprep.subr.mxu0 0.0
    %119 = vmatpush1.msra.mxu0 0.0
    %120 = vmatprep.subr.mxu0 0.0
    %121 = vmatpush1.msra.mxu0 0.0
    %122 = vmatprep.mubr.f32.mxu0 0.0
    %123 = vmatmul.mubr.f32.gmra.mrb[0].mxu0 %v47
    %v124 = vpop.f32.mrb[0].mxu0
    %v125 = vadd.f32 %v43, %v124
    %v126 = vpop.f32.mrb[0].mxu0
    %127 = vmatprep.mubr.f32.mxu0 0.0
    %128 = vmatmul.mubr.f32.gmra.mrb[0].mxu0 %v50
    %v129 = vpop.f32.mrb[0].mxu0
    %v130 = vadd.f32 %v43, %v129
    %v131 = vpop.f32.mrb[0].mxu0
    %132 = vmatprep.mubr.f32.mxu0 0.0
    %133 = vmatmul.mubr.f32.gmra.mrb[0].mxu0 %v53
    %v134 = vpop.f32.mrb[0].mxu0
    %v135 = vadd.f32 %v43, %v134
    %v136 = vpop.f32.mrb[0].mxu0
    %137 = vmatprep.mubr.f32.mxu0 0.0
    %138 = vmatmul.mubr.f32.gmra.mrb[0].mxu0 %v56
    %v139 = vpop.f32.mrb[0].mxu0
    %v140 = vadd.f32 %v43, %v139
    %v141 = vpop.f32.mrb[0].mxu0
    %142 = vdwg.mxu0
    %v143 = vtanh.pop %v125
    %v144 = vtanh.pop %v130
    %v145 = vtanh.pop %v135
    %v146 = vtanh.pop %v140
    %v147 = vld [vmem:[%s3] sm:$0x1]
    %v149 = vlaneseq
    %v150 = vshrl.u32 %v149, 7
    %v151 = vsub.s32 0, %v150
    %v152 = vrot.slane %v147, %v151
    %v154 = vmul.f32 %v143, %v152
    %v155 = vmul.f32 %v144, %v152
    %v156 = vmul.f32 %v145, %v152
    %v157 = vmul.f32 %v146, %v152
    %vm158 = vcmask 130048
    %v159 = vsel %vm158, %v154, 0.0
    %160 = vadd.xlane.f32.xlu0 %v159
    %v161 = vpop.xlane.xlu0 %160
    %v162 = vsel %vm158, %v155, 0.0
    %163 = vadd.xlane.f32.xlu0 %v162
    %v164 = vpop.xlane.xlu0 %163
    %v165 = vsel %vm158, %v156, 0.0
    %166 = vadd.xlane.f32.xlu0 %v165
    %v167 = vpop.xlane.xlu0 %166
    %v168 = vsel %vm158, %v157, 0.0
    %169 = vadd.xlane.f32.xlu0 %v168
    %v170 = vpop.xlane.xlu0 %169
    %v175 = vlaneseq
    %v176 = vand.u32 %v175, 127
    %v177 = vlaneseq
    %v178 = vshrl.u32 %v177, 7
    %v179 = vsub.s32 %v176, %v178
    %v180 = vrot.slane %v161, %v179
    %v181 = vlaneseq
    %v182 = vshrl.u32 %v181, 7
    %v183 = vsub.s32 %v176, %v182
    %v184 = vrot.slane %v164, %v183
    %v185 = vlaneseq
    %v186 = vshrl.u32 %v185, 7
    %v187 = vsub.s32 %v176, %v186
    %v188 = vrot.slane %v167, %v187
    %v189 = vlaneseq
    %v190 = vshrl.u32 %v189, 7
    %v191 = vsub.s32 %v176, %v190
    %v192 = vrot.slane %v170, %v191
    %vm193 = vcmask 1041409
    %v194 = vsel %vm193, %v184, %v180
    %vm195 = vcmask 1042434
    %v196 = vsel %vm195, %v188, %v194
    %vm197 = vcmask 1043459
    %v198 = vsel %vm197, %v192, %v196
    %s200 = smul.u32 0, 4
    %s201 = scalar_lea.vmem [#allocation5], %s200
    %vm202 = vcmask 60416
    %203 = vst.msk [vmem:[%s201] sm:$0xf] %vm202, %v198
    %v204 = vld [vmem:[#allocation2] sm:$0xf]
    %v205 = vsel %vm202, %v198, -inf
    %206 = vmax.xlane.f32.xlu0 %v205
    %v207 = vpop.xlane.xlu0 %206
    %v208 = vmax.f32 %v204, %v207
    %v209 = vsub.f32 %v204, %v208
    %v210 = vmul.f32 %v209, 1.442695
    %v211 = vpow.pop %v210
    %213 = vset.pattern.permute.xlu0 0
    %214 = vperm.xlu0 %213, %v208
    %v215 = vpop.permute.xlu0 %214
    %v216 = vlaneseq
    %v217 = vshrl.u32 %v216, 7
    %v218 = vsub.s32 0, %v217
    %v219 = vrot.slane %v215, %v218
    %v220 = vlaneseq
    %v221 = vshrl.u32 %v220, 7
    %v222 = vsub.s32 1, %v221
    %v223 = vrot.slane %v215, %v222
    %v224 = vlaneseq
    %v225 = vshrl.u32 %v224, 7
    %v226 = vsub.s32 2, %v225
    %v227 = vrot.slane %v215, %v226
    %v228 = vlaneseq
    %v229 = vshrl.u32 %v228, 7
    %v230 = vsub.s32 3, %v229
    %v231 = vrot.slane %v215, %v230
    %v236 = vsub.f32 %v161, %v219
    %v237 = vsub.f32 %v164, %v223
    %v238 = vsub.f32 %v167, %v227
    %v239 = vsub.f32 %v170, %v231
    %v240 = vmul.f32 %v236, 1.442695
    %v241 = vpow.pop %v240
    %v242 = vmul.f32 %v237, 1.442695
    %v243 = vpow.pop %v242
    %v244 = vmul.f32 %v238, 1.442695
    %v245 = vpow.pop %v244
    %v246 = vmul.f32 %v239, 1.442695
    %v247 = vpow.pop %v246
    %v248 = vld [vmem:[#allocation3] sm:$0xf]
    %v249 = vmul.f32 %v211, %v248
    %254 = vset.pattern.permute.xlu0 0
    %255 = vperm.xlu0 %254, %v241
    %v256 = vpop.permute.xlu0 %255
    %257 = vset.pattern.permute.xlu0 0
    %258 = vperm.xlu0 %257, %v243
    %v259 = vpop.permute.xlu0 %258
    %260 = vset.pattern.permute.xlu0 0
    %261 = vperm.xlu0 %260, %v245
    %v262 = vpop.permute.xlu0 %261
    %263 = vset.pattern.permute.xlu0 0
    %264 = vperm.xlu0 %263, %v247
    %v265 = vpop.permute.xlu0 %264
    %v266 = vlaneseq
    %v267 = vshrl.u32 %v266, 7
    %v268 = vsub.s32 %v176, %v267
    %v269 = vrot.slane %v256, %v268
    %v270 = vlaneseq
    %v271 = vshrl.u32 %v270, 7
    %v272 = vsub.s32 %v176, %v271
    %v273 = vrot.slane %v259, %v272
    %v274 = vlaneseq
    %v275 = vshrl.u32 %v274, 7
    %v276 = vsub.s32 %v176, %v275
    %v277 = vrot.slane %v262, %v276
    %v278 = vlaneseq
    %v279 = vshrl.u32 %v278, 7
    %v280 = vsub.s32 %v176, %v279
    %v281 = vrot.slane %v265, %v280
    %v282 = vsel %vm193, %v273, %v269
    %v283 = vsel %vm195, %v277, %v282
    %v284 = vsel %vm197, %v281, %v283
    %v286 = vsel %vm202, %v284, 0.0
    %287 = vadd.xlane.f32.xlu0 %v286
    %v288 = vpop.xlane.xlu0 %287
    %v289 = vadd.f32 %v249, %v288
    %vm290 = vcmask 3072
    %291 = vst.msk [vmem:[#allocation3] sm:$0xf] %vm290, %v289
    %v292 = vld [vmem:[#allocation4] sm:$0xf]
    %294 = vset.pattern.permute.xlu0 0
    %295 = vperm.xlu0 %294, %v211
    %v296 = vpop.permute.xlu0 %295
    %v298 = vmul.f32 %v296, %v292
    %v303 = vmul.f32 %v30, %v256
    %v304 = vmul.f32 %v31, %v259
    %v305 = vmul.f32 %v32, %v262
    %v306 = vmul.f32 %v33, %v265
    %v307 = vsel %vm45, %v303, 0.0
    %v308 = vrot.slane %v307, 4
    %v309 = vadd.f32 %v307, %v308
    %v310 = vrot.slane %v309, 2
    %v311 = vadd.f32 %v309, %v310
    %v312 = vrot.slane %v311, 1
    %v313 = vadd.f32 %v311, %v312
    %v314 = vsel %vm45, %v304, 0.0
    %v315 = vrot.slane %v314, 4
    %v316 = vadd.f32 %v314, %v315
    %v317 = vrot.slane %v316, 2
    %v318 = vadd.f32 %v316, %v317
    %v319 = vrot.slane %v318, 1
    %v320 = vadd.f32 %v318, %v319
    %v321 = vsel %vm45, %v305, 0.0
    %v322 = vrot.slane %v321, 4
    %v323 = vadd.f32 %v321, %v322
    %v324 = vrot.slane %v323, 2
    %v325 = vadd.f32 %v323, %v324
    %v326 = vrot.slane %v325, 1
    %v327 = vadd.f32 %v325, %v326
    %v328 = vsel %vm45, %v306, 0.0
    %v329 = vrot.slane %v328, 4
    %v330 = vadd.f32 %v328, %v329
    %v331 = vrot.slane %v330, 2
    %v332 = vadd.f32 %v330, %v331
    %v333 = vrot.slane %v332, 1
    %v334 = vadd.f32 %v332, %v333
    %v339 = vsel %vm193, %v320, %v313
    %v340 = vsel %vm195, %v327, %v339
    %v341 = vsel %vm197, %v334, %v340
    %v343 = vadd.f32 %v298, %v341
    %vm344 = vcmask 257024
    %345 = vst.msk [vmem:[#allocation4] sm:$0xf] %vm344, %v343
    %346 = vst.msk [vmem:[#allocation2] sm:$0xf] %vm290, %v208
    // Predicated region
    $region22: #{tpu_custom_call.1} parent=1 // pred_check
      %p347 = pneg %p21
    $region23: #{tpu_custom_call.1} parent=1 // pred_check_branch
      %349 = sbr.rel (%p347) target = $region25
    $region24: #{tpu_custom_call.1} parent=1 // pred_region
      %v350 = vld [vmem:[#allocation3] sm:$0xf]
      %v351 = vrcp.pop %v350
      %v352 = vld [vmem:[#allocation4] sm:$0xf]
      %354 = vset.pattern.permute.xlu0 0
      %355 = vperm.xlu0 %354, %v351
      %v356 = vpop.permute.xlu0 %355
      %v358 = vmul.f32 %v352, %v356
      %359 = vst.msk [vmem:[#allocation6] sm:$0xf] %vm344, %v358
      %v360 = vld [vmem:[#allocation5] sm:$0xf]
      %v361 = vld [vmem:[#allocation2] sm:$0xf]
      %363 = vset.pattern.permute.xlu0 0
      %364 = vperm.xlu0 %363, %v361
      %v365 = vpop.permute.xlu0 %364
      %v367 = vsub.f32 %v360, %v365
      %v368 = vmul.f32 %v367, 1.442695
      %v369 = vpow.pop %v368
      %v370 = vmul.f32 %v369, %v356
      %371 = vst.msk [vmem:[#allocation8] sm:$0xf] %vm202, %v370
    $region25: #{tpu_custom_call.1} parent=1 // pred_fallthru
      _
    // Predicated region
    $region26: #{tpu_custom_call.1} parent=1 // pred_check
      _
    $region27: #{tpu_custom_call.1} parent=1 // pred_check_branch
      %373 = sbr.rel (0) target = $region29
    $region28: #{tpu_custom_call.1} parent=1 // pred_region
      %s375 = ssub.s32 64, 64
      %376 = vsyncadd [#allocation7], %s375
      %s378 = sshll.u32 [#allocation6], 4
      %s379 = int_to_ptr.vmem [resolvable:$true] %s378
      %381 = dma.vmem_to_hbm [thread:$0]  %s379, 64, %s4, [#allocation7]
    $region29: #{tpu_custom_call.1} parent=1 // pred_fallthru
      _
    // Predicated region
    $region30: #{tpu_custom_call.1} parent=1 // pred_check
      _
    $region31: #{tpu_custom_call.1} parent=1 // pred_check_branch
      %383 = sbr.rel (0) target = $region33
    $region32: #{tpu_custom_call.1} parent=1 // pred_region
      %s385 = ssub.s32 64, 64
      %386 = vsyncadd [#allocation9], %s385
      %s388 = sshll.u32 [#allocation8], 4
      %s389 = int_to_ptr.vmem [resolvable:$true] %s388
      %391 = dma.vmem_to_hbm [thread:$0]  %s389, 64, %s5, [#allocation9]
    $region33: #{tpu_custom_call.1} parent=1 // pred_fallthru
      _
    // Predicated region
    $region34: #{tpu_custom_call.1} parent=1 // pred_check
      _
    $region35: #{tpu_custom_call.1} parent=1 // pred_check_branch
      %393 = sbr.rel (0) target = $region37
    $region36: #{tpu_custom_call.1} parent=1 // pred_region
      %394 = dma.done [#allocation7], 64
    $region37: #{tpu_custom_call.1} parent=1 // pred_fallthru
      _
    // Predicated region
    $region38: #{tpu_custom_call.1} parent=1 // pred_check
      _
    $region39: #{tpu_custom_call.1} parent=1 // pred_check_branch
      %396 = sbr.rel (0) target = $region41
    $region40: #{tpu_custom_call.1} parent=1 // pred_region
      %397 = dma.done [#allocation9], 64
    $region41: #{tpu_custom_call.1} parent=1 // pred_fallthru
      _
    %398 = vsyncpa [#allocation7], 1
    %399 = vsyncpa [#allocation9], 1

</llo_original>
